<compile_context>
chip_gen: v5e
topology: v5e:2x2
jax: 0.10.0
libtpu: 0.0.40
codegen_flags: <defaults>
</compile_context>

<pallas_src>
import math

import numpy as np
import jax
import jax.numpy as jnp
from jax.experimental import pallas as pl
from jax.experimental.pallas import tpu as pltpu

_INV_SQRT2 = 1.0 / math.sqrt(2.0)
_MIB = 1024 * 1024


def _round_up(x, m):
    return ((x + m - 1) // m) * m


def _cdiv(a, b):
    return (a + b - 1) // b


# ---------------------------------------------------------------------------
# Kernel: grid = (row tile i, out-col tile j, hidden tile k); k is the reduction.
# ---------------------------------------------------------------------------
def _mlp_kernel(x_ref, w1_ref, b1_ref, w2_ref, b2_ref, o_ref, acc_ref):
    k = pl.program_id(2)

    # fc1 partial: [tm, Dp] @ [Dp, tk] -> f32 on the MXU; bias + exact (erf)
    # GELU in f32 (v5e has no bf16 VPU/EUP).
    h = jnp.dot(x_ref[...], w1_ref[...], preferred_element_type=jnp.float32)
    h = h + b1_ref[...]
    h = 0.5 * h * (1.0 + jax.lax.erf(h * _INV_SQRT2))

    # fc2 partial on the MXU (native dtype in, f32 out).
    y = jnp.dot(h.astype(w2_ref.dtype), w2_ref[...],
                preferred_element_type=jnp.float32)

    @pl.when(k == 0)
    def _():                 # first hidden tile: plain assign (no zero-init pass)
        acc_ref[...] = y

    @pl.when(k > 0)
    def _():
        acc_ref[...] += y

    @pl.when(k == pl.num_programs(2) - 1)
    def _():                 # add fc2 bias once, cast, write the output tile
        o_ref[...] = (acc_ref[...] + b2_ref[...]).astype(o_ref.dtype)


# ---------------------------------------------------------------------------
# Hardware probe + VMEM accounting
# ---------------------------------------------------------------------------
def _hw_info():
    vmem_cap = 64 * _MIB          # conservative fallback (safe on every gen)
    num_cores = 1
    try:
        info = pltpu.get_tpu_info()
        vmem_cap = int(getattr(info, "vmem_capacity_bytes", vmem_cap))
        for attr in ("num_tensorcores", "tensorcore_count", "num_cores", "core_count"):
            v = getattr(info, attr, None)
            if isinstance(v, int) and v > 0:
                num_cores = v
                break
    except Exception:
        pass
    if num_cores == 1:
        try:
            kind = jax.local_devices()[0].device_kind.lower()
            if "v7" in kind or "7x" in kind:
                num_cores = 2     # v7x: 2 TensorCores per chip
        except Exception:
            pass
    return vmem_cap, num_cores


def _vmem_bytes(tm, dp, tk, tj, cbytes, obytes):
    """Working-set estimate for one grid step (double-buffered tiles + scratch)."""
    return (2 * tm * dp * cbytes        # x row tile
            + 2 * dp * tk * cbytes      # W1 tile
            + 2 * 8 * tk * 4            # b1 tile (f32, sublane padded)
            + 2 * tk * tj * cbytes      # W2 tile
            + 2 * 8 * tj * 4            # b2 tile
            + 2 * tm * tj * obytes      # output tile
            + tm * tj * 4)              # f32 accumulator scratch


# ---------------------------------------------------------------------------
# Wrapper: parameters padded/cast ONCE at construction (hoisted off call path)
# ---------------------------------------------------------------------------
class MlpPallas:
    """y = fc2(GELU(fc1(x))); dropout(p=0.0) is the identity."""

    def __init__(self, w1, b1, w2, b2, *, mxu_dtype=jnp.bfloat16,
                 tm_max=None, tk_max=None):
        d_in, hid = w1.shape
        hid2, d_out = w2.shape
        assert hid2 == hid and b1.shape == (hid,) and b2.shape == (d_out,)
        self.d_in, self.hid, self.d_out = d_in, hid, d_out

        self.cdt = mxu_dtype if mxu_dtype is not None else w1.dtype
        self.cbytes = np.dtype(self.cdt).itemsize

        vmem_cap, self.num_cores = _hw_info()
        self.budget = int(vmem_cap * 0.75)           # ~96 MiB v5e/v6e, ~48 MiB v7x

        # Generation-aware default tile caps.
        big = self.budget >= 80 * _MIB
        self.tm_max = tm_max if tm_max is not None else (512 if big else 256)
        tk_max = tk_max if tk_max is not None else (1024 if big else 512)

        # Lane-aligned (128) padded feature dims.
        self.dp = _round_up(d_in, 128)
        self.op = _round_up(d_out, 128)
        h_blocks = _cdiv(hid, 128)
        op_blocks = self.op // 128

        # Hidden tile: multiple of 128 covering the 128-rounded hidden dim in
        # n_k balanced tiles (no round-up-to-tk padding blowup).
        n_k = _cdiv(h_blocks, max(tk_max // 128, 1))
        tk_blocks = _cdiv(h_blocks, n_k)

        # Shrink tiles until the worst-case (tm = tm_max, f32 output) working
        # set fits the VMEM budget.
        min_nj = 1
        while True:
            tj = (op_blocks // min_nj) * 128
            if _vmem_bytes(self.tm_max, self.dp, tk_blocks * 128, tj,
                           self.cbytes, 4) <= self.budget:
                break
            if tk_blocks > 1:
                n_k += 1
                tk_blocks = _cdiv(h_blocks, n_k)
            elif self.tm_max > 8:
                self.tm_max = max(8, _round_up(self.tm_max // 2, 8))
            elif (op_blocks // min_nj) > 1:
                nj = min_nj + 1
                while op_blocks % nj:
                    nj += 1
                min_nj = nj
            else:
                break

        self.tk = tk_blocks * 128
        self.n_k = n_k
        self.hp = self.tk * self.n_k                 # >= round_up(hid, 128)
        self.min_nj = min_nj

        # One-time pad + cast (zero padding is semantics preserving: zero W1
        # rows; padded hidden cols -> GELU(0)=0 -> zero W2 rows; padded out
        # columns are sliced off).
        cdt = self.cdt
        self.w1p = jnp.zeros((self.dp, self.hp), cdt).at[:d_in, :hid].set(w1.astype(cdt))
        self.w2p = jnp.zeros((self.hp, self.op), cdt).at[:hid, :d_out].set(w2.astype(cdt))
        self.b1p = jnp.zeros((1, self.hp), jnp.float32).at[0, :hid].set(b1.astype(jnp.float32))
        self.b2p = jnp.zeros((1, self.op), jnp.float32).at[0, :d_out].set(b2.astype(jnp.float32))

    def __call__(self, x):
        n, d_in = x.shape
        assert d_in == self.d_in
        out_dtype = x.dtype

        # Row tile: minimize padding for this n (never exceeds the VMEM-checked
        # tm_max chosen at construction).
        n8 = _round_up(max(n, 1), 8)
        n_i = _cdiv(n8, self.tm_max)
        tm = _round_up(_cdiv(n8, n_i), 8)
        n_p = tm * n_i

        # Output-column tiles: one tile normally; split in two when a single
        # row tile would leave v7x's second TensorCore idle.
        op_blocks = self.op // 128
        n_j = self.min_nj
        if self.num_cores >= 2 and n_i == 1 and n_j == 1 and op_blocks % 2 == 0:
            n_j = 2
        tj = (op_blocks // n_j) * 128

        # Pad/cast the activations only when actually required.
        if n_p == n and self.dp == d_in and x.dtype == self.cdt:
            xp = x
        else:
            xp = jnp.zeros((n_p, self.dp), self.cdt).at[:n, :d_in].set(x.astype(self.cdt))

        est = _vmem_bytes(tm, self.dp, self.tk, tj, self.cbytes,
                          np.dtype(out_dtype).itemsize)
        vmem_limit = int(min(self.budget, max(2 * est + 8 * _MIB, 32 * _MIB)))

        dp, tk, op = self.dp, self.tk, self.op
        out_padded = pl.pallas_call(
            _mlp_kernel,
            out_shape=jax.ShapeDtypeStruct((n_p, op), out_dtype),
            grid_spec=pltpu.PrefetchScalarGridSpec(
                num_scalar_prefetch=0,
                grid=(n_i, n_j, self.n_k),
                in_specs=[
                    pl.BlockSpec((tm, dp), lambda i, j, k: (i, 0)),   # x (resident over j,k)
                    pl.BlockSpec((dp, tk), lambda i, j, k: (0, k)),   # W1 column tile
                    pl.BlockSpec((1, tk), lambda i, j, k: (0, k)),    # b1 tile
                    pl.BlockSpec((tk, tj), lambda i, j, k: (k, j)),   # W2 tile
                    pl.BlockSpec((1, tj), lambda i, j, k: (0, j)),    # b2 tile (finalize only)
                ],
                out_specs=pl.BlockSpec((tm, tj), lambda i, j, k: (i, j)),
                scratch_shapes=[pltpu.VMEM((tm, tj), jnp.float32)],
            ),
            compiler_params=pltpu.CompilerParams(
                dimension_semantics=("parallel", "parallel", "arbitrary"),
                vmem_limit_bytes=vmem_limit,
            ),
        )(xp, self.w1p, self.b1p, self.w2p, self.b2p)

        return out_padded[:n, :self.d_out]


# ---------------------------------------------------------------------------
# Reference + test
# ---------------------------------------------------------------------------
def mlp_reference(x, w1, b1, w2, b2):
    h = x @ w1 + b1
    h = 0.5 * h * (1.0 + jax.lax.erf(h * _INV_SQRT2))
    return h @ w2 + b2


def _make_params(key, d_in, hid, d_out):
    k1, k2, k3, k4 = jax.random.split(key, 4)
    bound1 = 1.0 / math.sqrt(d_in)
    bound2 = 1.0 / math.sqrt(hid)
    w1 = jax.random.uniform(k1, (d_in, hid), jnp.float32, -bound1, bound1)
    b1 = jax.random.uniform(k2, (hid,), jnp.float32, -bound1, bound1)
    w2 = jax.random.uniform(k3, (hid, d_out), jnp.float32, -bound2, bound2)
    b2 = jax.random.uniform(k4, (d_out,), jnp.float32, -bound2, bound2)
    return w1, b1, w2, b2


if __name__ == "__main__":
    key = jax.random.PRNGKey(0)

    # Case 1: small shapes implied by the module's usage; exact f32 path.
    N, D_IN, HID, D_OUT = 8, 32, 64, 32
    kx, kp = jax.random.split(key)
    x = jax.random.normal(kx, (N, D_IN), dtype=jnp.float32)
    w1, b1, w2, b2 = _make_params(kp, D_IN, HID, D_OUT)
    ref = mlp_reference(x, w1, b1, w2, b2)

    mlp_f32 = MlpPallas(w1, b1, w2, b2, mxu_dtype=None)
    out_f32 = jax.block_until_ready(mlp_f32(x))
    assert out_f32.shape == (N, D_OUT)
    assert jnp.allclose(out_f32, ref, atol=1e-5, rtol=1e-5), "f32 mismatch vs reference"

    # Same weights, bf16 MXU path; params were padded/cast once at construction,
    # second call reuses them (no per-call weight copies).
    mlp_bf16 = MlpPallas(w1, b1, w2, b2)
    out_bf16 = jax.block_until_ready(mlp_bf16(x))
    assert jnp.allclose(out_bf16, ref, atol=3e-2, rtol=3e-2), "bf16 mismatch vs reference"
    _ = jax.block_until_ready(mlp_bf16(x))

    # Case 2: non-tile-divisible shapes -> exercises minimal-padding row tiles
    # (N=300), hidden-reduction tiling (HID=640 with tk=256 -> 3 k-steps) and
    # lane padding of Din/Dout.
    N2, D_IN2, HID2, D_OUT2 = 300, 192, 640, 320
    key2 = jax.random.PRNGKey(1)
    kx2, kp2 = jax.random.split(key2)
    x2 = jax.random.normal(kx2, (N2, D_IN2), dtype=jnp.float32)
    p2 = _make_params(kp2, D_IN2, HID2, D_OUT2)
    mlp2 = MlpPallas(*p2, tm_max=128, tk_max=256)
    out2 = jax.block_until_ready(mlp2(x2))
    ref2 = mlp_reference(x2, *p2)
    assert out2.shape == (N2, D_OUT2)
    assert jnp.allclose(out2, ref2, atol=3e-2, rtol=3e-2), "tiled bf16 mismatch vs reference"

    print("KERNEL_OK")
</pallas_src>

<mosaic_0001>
module attributes {stable_mosaic.version = 11 : i64} {
  func.func @_mlp_kernel(%arg0: i32, %arg1: i32, %arg2: i32, %arg3: memref<8x128xf32, #tpu.memory_space<vmem>>, %arg4: memref<128x128xf32, #tpu.memory_space<vmem>>, %arg5: memref<1x128xf32, #tpu.memory_space<vmem>>, %arg6: memref<128x128xf32, #tpu.memory_space<vmem>>, %arg7: memref<1x128xf32, #tpu.memory_space<vmem>>, %arg8: memref<8x128xf32, #tpu.memory_space<vmem>>, %arg9: memref<8x128xf32, #tpu.memory_space<vmem>>) attributes {dimension_semantics = [#tpu.dimension_semantics<parallel>, #tpu.dimension_semantics<parallel>, #tpu.dimension_semantics<arbitrary>], iteration_bounds = array<i64: 1, 1, 1>, scalar_prefetch = 0 : i64, scratch_operands = 1 : i64, tpu.core_type = #tpu.core_type<tc>, window_params = [{transform_indices = @transform_0, window_bounds = array<i64: 8, 128>}, {transform_indices = @transform_1, window_bounds = array<i64: 128, 128>}, {transform_indices = @transform_2, window_bounds = array<i64: 1, 128>}, {transform_indices = @transform_3, window_bounds = array<i64: 128, 128>}, {transform_indices = @transform_4, window_bounds = array<i64: 1, 128>}, {transform_indices = @transform_5, window_bounds = array<i64: 8, 128>}]} {
    %c0 = arith.constant 0 : index
    %c0_0 = arith.constant 0 : index
    %0 = vector.load %arg3[%c0, %c0_0] : memref<8x128xf32, #tpu.memory_space<vmem>>, vector<8x128xf32>
    %c0_1 = arith.constant 0 : index
    %c0_2 = arith.constant 0 : index
    %1 = vector.load %arg4[%c0_1, %c0_2] : memref<128x128xf32, #tpu.memory_space<vmem>>, vector<128x128xf32>
    %cst = arith.constant dense<0.000000e+00> : vector<8x128xf32>
    %2 = tpu.matmul %0, %1, %cst {dimension_numbers = #tpu.dot_dimension_numbers<[1], [0], [0], [1], [0, 0, 1, 1], [], []>} : vector<8x128xf32>, vector<128x128xf32>, vector<8x128xf32> -> vector<8x128xf32>
    %c0_3 = arith.constant 0 : index
    %c0_4 = arith.constant 0 : index
    %3 = vector.load %arg5[%c0_3, %c0_4] : memref<1x128xf32, #tpu.memory_space<vmem>>, vector<1x128xf32>
    %4 = vector.broadcast %3 : vector<1x128xf32> to vector<8x128xf32>
    %5 = arith.addf %2, %4 : vector<8x128xf32>
    %cst_5 = arith.constant 5.000000e-01 : f32
    %6 = vector.broadcast %cst_5 : f32 to vector<8x128xf32>
    %7 = arith.mulf %6, %5 : vector<8x128xf32>
    %cst_6 = arith.constant 0.707106769 : f32
    %8 = vector.broadcast %cst_6 : f32 to vector<8x128xf32>
    %9 = arith.mulf %5, %8 : vector<8x128xf32>
    %10 = math.erf %9 : vector<8x128xf32>
    %cst_7 = arith.constant 1.000000e+00 : f32
    %11 = vector.broadcast %cst_7 : f32 to vector<8x128xf32>
    %12 = arith.addf %11, %10 : vector<8x128xf32>
    %13 = arith.mulf %7, %12 : vector<8x128xf32>
    %c0_8 = arith.constant 0 : index
    %c0_9 = arith.constant 0 : index
    %14 = vector.load %arg6[%c0_8, %c0_9] : memref<128x128xf32, #tpu.memory_space<vmem>>, vector<128x128xf32>
    %cst_10 = arith.constant dense<0.000000e+00> : vector<8x128xf32>
    %15 = tpu.matmul %13, %14, %cst_10 {dimension_numbers = #tpu.dot_dimension_numbers<[1], [0], [0], [1], [0, 0, 1, 1], [], []>} : vector<8x128xf32>, vector<128x128xf32>, vector<8x128xf32> -> vector<8x128xf32>
    %c0_i32 = arith.constant 0 : i32
    %16 = arith.cmpi eq, %arg2, %c0_i32 : i32
    %17 = arith.extui %16 : i1 to i32
    %c0_i32_11 = arith.constant 0 : i32
    %18 = arith.cmpi ne, %17, %c0_i32_11 : i32
    scf.if %18 {
      %c0_16 = arith.constant 0 : index
      %c0_17 = arith.constant 0 : index
      %25 = vector.load %arg9[%c0_16, %c0_17] : memref<8x128xf32, #tpu.memory_space<vmem>>, vector<8x128xf32>
      tpu.vector_store %arg9[%c0_16, %c0_17], %15 {strides = array<i32>} : memref<8x128xf32, #tpu.memory_space<vmem>>, vector<8x128xf32>,
    } else {
    }
    %c0_i32_12 = arith.constant 0 : i32
    %19 = arith.cmpi sgt, %arg2, %c0_i32_12 : i32
    %20 = arith.extui %19 : i1 to i32
    %c0_i32_13 = arith.constant 0 : i32
    %21 = arith.cmpi ne, %20, %c0_i32_13 : i32
    scf.if %21 {
      %c0_16 = arith.constant 0 : index
      %c0_17 = arith.constant 0 : index
      %25 = vector.load %arg9[%c0_16, %c0_17] : memref<8x128xf32, #tpu.memory_space<vmem>>, vector<8x128xf32>
      %26 = arith.addf %25, %15 : vector<8x128xf32>
      %c0_18 = arith.constant 0 : index
      %c0_19 = arith.constant 0 : index
      %27 = vector.load %arg9[%c0_18, %c0_19] : memref<8x128xf32, #tpu.memory_space<vmem>>, vector<8x128xf32>
      tpu.vector_store %arg9[%c0_18, %c0_19], %26 {strides = array<i32>} : memref<8x128xf32, #tpu.memory_space<vmem>>, vector<8x128xf32>,
    } else {
    }
    %c0_i32_14 = arith.constant 0 : i32
    %22 = arith.cmpi eq, %arg2, %c0_i32_14 : i32
    %23 = arith.extui %22 : i1 to i32
    %c0_i32_15 = arith.constant 0 : i32
    %24 = arith.cmpi ne, %23, %c0_i32_15 : i32
    scf.if %24 {
      %c0_16 = arith.constant 0 : index
      %c0_17 = arith.constant 0 : index
      %25 = vector.load %arg9[%c0_16, %c0_17] : memref<8x128xf32, #tpu.memory_space<vmem>>, vector<8x128xf32>
      %c0_18 = arith.constant 0 : index
      %c0_19 = arith.constant 0 : index
      %26 = vector.load %arg7[%c0_18, %c0_19] : memref<1x128xf32, #tpu.memory_space<vmem>>, vector<1x128xf32>
      %27 = vector.broadcast %26 : vector<1x128xf32> to vector<8x128xf32>
      %28 = arith.addf %25, %27 : vector<8x128xf32>
      %c0_20 = arith.constant 0 : index
      %c0_21 = arith.constant 0 : index
      %29 = vector.load %arg8[%c0_20, %c0_21] : memref<8x128xf32, #tpu.memory_space<vmem>>, vector<8x128xf32>
      tpu.vector_store %arg8[%c0_20, %c0_21], %28 {strides = array<i32>} : memref<8x128xf32, #tpu.memory_space<vmem>>, vector<8x128xf32>,
    } else {
    }
    return
  }
  func.func @transform_0(%arg0: i32, %arg1: i32, %arg2: i32) -> (i32, i32) {
    %c0_i32 = arith.constant 0 : i32
    %c0_i32_0 = arith.constant 0 : i32
    return %arg0, %c0_i32 : i32, i32
  }
  func.func @transform_1(%arg0: i32, %arg1: i32, %arg2: i32) -> (i32, i32) {
    %c0_i32 = arith.constant 0 : i32
    %c0_i32_0 = arith.constant 0 : i32
    return %c0_i32, %arg2 : i32, i32
  }
  func.func @transform_2(%arg0: i32, %arg1: i32, %arg2: i32) -> (i32, i32) {
    %c0_i32 = arith.constant 0 : i32
    %c0_i32_0 = arith.constant 0 : i32
    return %c0_i32, %arg2 : i32, i32
  }
  func.func @transform_3(%arg0: i32, %arg1: i32, %arg2: i32) -> (i32, i32) {
    %c0_i32 = arith.constant 0 : i32
    return %arg2, %arg1 : i32, i32
  }
  func.func @transform_4(%arg0: i32, %arg1: i32, %arg2: i32) -> (i32, i32) {
    %c0_i32 = arith.constant 0 : i32
    %c0_i32_0 = arith.constant 0 : i32
    return %c0_i32, %arg1 : i32, i32
  }
  func.func @transform_5(%arg0: i32, %arg1: i32, %arg2: i32) -> (i32, i32) {
    %c0_i32 = arith.constant 0 : i32
    return %arg0, %arg1 : i32, i32
  }
}

</mosaic_0001>

<llo_original>
// kernel: tpu_custom_call.1
$region0: #{tpu_custom_call.1}
  #allocation0 [shape = 'u32[]', space=smem, size = 0x4, offset = 0x4, fixed_abs, tag = 'smem constant byte address 0x4 - core index']
  #allocation1 [shape = 'u32[72,128]{1,0:T(1,128)}', space=vmem, size = 0x9000, scoped, tag = 'internal scratch']
  #allocation2 [shape = 'f32[8,128]{1,0:T(8,128)}', space=vmem, size = 0x1000, scoped, tag = 'scratch operand']
  %s0 = inlined_call_operand.hbm [shape: f32[8,128], index: 0, kind: input, shape index: {}]
  %s1 = inlined_call_operand.hbm [shape: f32[128,128], index: 1, kind: input, shape index: {}]
  %s2 = inlined_call_operand.vmem [shape: f32[1,128], index: 2, kind: input, shape index: {}]
  %s3 = inlined_call_operand.hbm [shape: f32[128,128], index: 3, kind: input, shape index: {}]
  %s4 = inlined_call_operand.vmem [shape: f32[1,128], index: 4, kind: input, shape index: {}]
  %s5 = inlined_call_operand.hbm [shape: f32[8,128], index: 5, kind: output, shape index: {}]
  %s6 = sld [smem:[#allocation0]]
  $region54: #{tpu_custom_call.1} parent=0
    _
  %s8 = ssub.s32 1, %s6
  %s9 = scalar_select 0, %s8, %s6
  $region1: #{tpu_custom_call.1} parent=0
    #allocation3 [shape = 'u8[4096]{0}', space=vmem, size = 0x1000, scoped, tag = 'input window, operand 0, single buffered']
    #allocation4 [shape = 's32[1]{0}', space=sflag, size = 0x4, scoped, tag = 'scoped memory for tpu_custom_call.1']
    #allocation5 [shape = 's32[1]{0}', space=sflag, size = 0x4, scoped, tag = 'scoped memory for tpu_custom_call.1']
    #allocation6 [shape = 'u8[65536]{0}', space=vmem, size = 0x10000, scoped, tag = 'input window, operand 1, single buffered']
    #allocation7 [shape = 's32[1]{0}', space=sflag, size = 0x4, scoped, tag = 'scoped memory for tpu_custom_call.1']
    #allocation8 [shape = 'u8[65536]{0}', space=vmem, size = 0x10000, scoped, tag = 'input window, operand 3, single buffered']
    #allocation9 [shape = 'u8[4096]{0}', space=vmem, size = 0x1000, scoped, tag = 'output window, operand 0, single buffered']
    %10 = vsyncpa [#allocation4], 0
    %11 = vsyncpa [#allocation7], 0
    %12 = vsyncpa [#allocation5], 0
    // Predicated region
    $region2: #{tpu_custom_call.1} parent=1 // pred_check
      _
    $region3: #{tpu_custom_call.1} parent=1 // pred_check_branch
      %14 = sbr.rel (0) target = $region5
    $region4: #{tpu_custom_call.1} parent=1 // pred_region
      %16 = vsyncadd [#allocation4], 0
      %s18 = sshll.u32 %s0, 4
      %s19 = int_to_ptr.hbm [resolvable:$true] %s18
      %s20 = sshll.u32 [#allocation3], 4
      %s21 = int_to_ptr.vmem [resolvable:$true] %s20
      %23 = dma.hbm_to_vmem [thread:$0]  %s19, 128, %s21, [#allocation4]
    $region5: #{tpu_custom_call.1} parent=1 // pred_fallthru
      _
    // Predicated region
    $region6: #{tpu_custom_call.1} parent=1 // pred_check
      _
    $region7: #{tpu_custom_call.1} parent=1 // pred_check_branch
      %25 = sbr.rel (0) target = $region9
    $region8: #{tpu_custom_call.1} parent=1 // pred_region
      %27 = vsyncadd [#allocation7], 0
      %s28 = sshll.u32 %s1, 4
      %s29 = int_to_ptr.hbm [resolvable:$true] %s28
      %s30 = sshll.u32 [#allocation6], 4
      %s31 = int_to_ptr.vmem [resolvable:$true] %s30
      %36 = dma.hbm_to_vmem [thread:$0]  %s29, 2048, %s31, [#allocation7], 128, 128, 8
    $region9: #{tpu_custom_call.1} parent=1 // pred_fallthru
      _
    // Predicated region
    $region10: #{tpu_custom_call.1} parent=1 // pred_check
      _
    $region11: #{tpu_custom_call.1} parent=1 // pred_check_branch
      %38 = sbr.rel (0) target = $region13
    $region12: #{tpu_custom_call.1} parent=1 // pred_region
      _
    $region13: #{tpu_custom_call.1} parent=1 // pred_fallthru
      _
    // Predicated region
    $region14: #{tpu_custom_call.1} parent=1 // pred_check
      _
    $region15: #{tpu_custom_call.1} parent=1 // pred_check_branch
      %40 = sbr.rel (0) target = $region17
    $region16: #{tpu_custom_call.1} parent=1 // pred_region
      %42 = vsyncadd [#allocation7], 0
      %s43 = sshll.u32 %s3, 4
      %s44 = int_to_ptr.hbm [resolvable:$true] %s43
      %s45 = sshll.u32 [#allocation8], 4
      %s46 = int_to_ptr.vmem [resolvable:$true] %s45
      %51 = dma.hbm_to_vmem [thread:$0]  %s44, 2048, %s46, [#allocation7], 128, 128, 8
    $region17: #{tpu_custom_call.1} parent=1 // pred_fallthru
      _
    // Predicated region
    $region18: #{tpu_custom_call.1} parent=1 // pred_check
      _
    $region19: #{tpu_custom_call.1} parent=1 // pred_check_branch
      %53 = sbr.rel (0) target = $region21
    $region20: #{tpu_custom_call.1} parent=1 // pred_region
      _
    $region21: #{tpu_custom_call.1} parent=1 // pred_fallthru
      _
    // Predicated region
    $region22: #{tpu_custom_call.1} parent=1 // pred_check
      _
    $region23: #{tpu_custom_call.1} parent=1 // pred_check_branch
      %55 = sbr.rel (0) target = $region25
    $region24: #{tpu_custom_call.1} parent=1 // pred_region
      %57 = dma.done [#allocation4], 128
    $region25: #{tpu_custom_call.1} parent=1 // pred_fallthru
      _
    // Predicated region
    $region26: #{tpu_custom_call.1} parent=1 // pred_check
      _
    $region27: #{tpu_custom_call.1} parent=1 // pred_check_branch
      %59 = sbr.rel (0) target = $region29
    $region28: #{tpu_custom_call.1} parent=1 // pred_region
      %61 = dma.done [#allocation7], 2048
    $region29: #{tpu_custom_call.1} parent=1 // pred_fallthru
      _
    // Predicated region
    $region30: #{tpu_custom_call.1} parent=1 // pred_check
      _
    $region31: #{tpu_custom_call.1} parent=1 // pred_check_branch
      %63 = sbr.rel (0) target = $region33
    $region32: #{tpu_custom_call.1} parent=1 // pred_region
      %65 = dma.done [#allocation7], 2048
    $region33: #{tpu_custom_call.1} parent=1 // pred_fallthru
      _
    %v66 = vld [vmem:[#allocation3] sm:$0xff]
    %v67 = vld [vmem:[#allocation6] sm:$0xff]
    %v68 = vld [vmem:[#allocation6 + $0x8] sm:$0xff]
    %v69 = vld [vmem:[#allocation6 + $0x10] sm:$0xff]
    %v70 = vld [vmem:[#allocation6 + $0x18] sm:$0xff]
    %v71 = vld [vmem:[#allocation6 + $0x20] sm:$0xff]
    %v72 = vld [vmem:[#allocation6 + $0x28] sm:$0xff]
    %v73 = vld [vmem:[#allocation6 + $0x30] sm:$0xff]
    %v74 = vld [vmem:[#allocation6 + $0x38] sm:$0xff]
    %v75 = vld [vmem:[#allocation6 + $0x40] sm:$0xff]
    %v76 = vld [vmem:[#allocation6 + $0x48] sm:$0xff]
    %v77 = vld [vmem:[#allocation6 + $0x50] sm:$0xff]
    %v78 = vld [vmem:[#allocation6 + $0x58] sm:$0xff]
    %v79 = vld [vmem:[#allocation6 + $0x60] sm:$0xff]
    %v80 = vld [vmem:[#allocation6 + $0x68] sm:$0xff]
    %v81 = vld [vmem:[#allocation6 + $0x70] sm:$0xff]
    %v82 = vld [vmem:[#allocation6 + $0x78] sm:$0xff]
    %v83 = vld [vmem:[%s2] sm:$0x1]
    %v85 = vperm.slane %v83, 0
    %87 = vmatpush.msra.mxu0 %v82
    %88 = vmatpush.msra.mxu0 %v81
    %89 = vmatpush.msra.mxu0 %v80
    %90 = vmatpush.msra.mxu0 %v79
    %91 = vmatpush.msra.mxu0 %v78
    %92 = vmatpush.msra.mxu0 %v77
    %93 = vmatpush.msra.mxu0 %v76
    %94 = vmatpush.msra.mxu0 %v75
    %95 = vmatpush.msra.mxu0 %v74
    %96 = vmatpush.msra.mxu0 %v73
    %97 = vmatpush.msra.mxu0 %v72
    %98 = vmatpush.msra.mxu0 %v71
    %99 = vmatpush.msra.mxu0 %v70
    %100 = vmatpush.msra.mxu0 %v69
    %101 = vmatpush.msra.mxu0 %v68
    %102 = vmatpush.msra.mxu0 %v67
    %103 = vmatmul.f32.gmra.mxu0 %v66
    %v104 = vpop.f32.mrf.mxu0
    %v105 = vadd.f32 %v85, %v104
    %106 = vdwg.mxu0
    %v107 = vmul.f32 %v105, 0.5
    %v108 = vmul.f32 %v105, 0.70710677
    %v109 = vmul.f32 %v108, %v108
    %v110 = vmin.f32 16.0, %v109
    %v111 = vmul.f32 %v110, 2.1237322e-06
    %v112 = vadd.f32 %v111, 0.00028619796
    %v113 = vmul.f32 %v110, %v112
    %v114 = vadd.f32 %v113, 0.0036580483
    %v115 = vmul.f32 %v110, %v114
    %v116 = vadd.f32 %v115, 0.05243302
    %v117 = vmul.f32 %v110, %v116
    %v118 = vadd.f32 %v117, 0.18741608
    %v119 = vmul.f32 %v110, %v118
    %v120 = vadd.f32 %v119, 1.1283791
    %v121 = vmul.f32 %v108, %v120
    %v122 = vmul.f32 %v110, 3.8918573e-05
    %v123 = vadd.f32 %v122, 0.001143296
    %v124 = vmul.f32 %v110, %v123
    %v125 = vadd.f32 %v124, 0.014752088
    %v126 = vmul.f32 %v110, %v125
    %v127 = vadd.f32 %v126, 0.112945676
    %v128 = vmul.f32 %v110, %v127
    %v129 = vadd.f32 %v128, 0.4994258
    %v130 = vmul.f32 %v110, %v129
    %v131 = vadd.f32 %v130, 1.0
    %v132 = vrcp.pop %v131
    %v133 = vmul.f32 %v131, %v132
    %v134 = vsub.f32 1.0, %v133
    %v135 = vmul.f32 %v132, %v134
    %v136 = vadd.f32 %v132, %v135
    %vm137 = vweird.f32 %v131
    %vm138 = vweird.f32 %v132
    %vm139 = vmor %vm137, %vm138
    %v140 = vsel %vm139, %v132, %v136
    %v141 = vand.u32 2147483647, %v131
    %vm142 = vcmp.eq.f32.partialorder %v141, 8.507059e+37
    %v143 = vand.u32 %v131, 2147483648
    %v144 = vor.u32 1.1754944e-38, %v143
    %v145 = vsel %vm142, %v144, %v140
    %v146 = vmul.f32 %v121, %v145
    %v147 = vmin.f32 %v146, 1.0
    %v148 = vmax.f32 %v147, -1.0
    %v149 = vadd.f32 %v148, 1.0
    %v150 = vmul.f32 %v107, %v149
    %v151 = vld [vmem:[#allocation8] sm:$0xff]
    %v152 = vld [vmem:[#allocation8 + $0x8] sm:$0xff]
    %v153 = vld [vmem:[#allocation8 + $0x10] sm:$0xff]
    %v154 = vld [vmem:[#allocation8 + $0x18] sm:$0xff]
    %v155 = vld [vmem:[#allocation8 + $0x20] sm:$0xff]
    %v156 = vld [vmem:[#allocation8 + $0x28] sm:$0xff]
    %v157 = vld [vmem:[#allocation8 + $0x30] sm:$0xff]
    %v158 = vld [vmem:[#allocation8 + $0x38] sm:$0xff]
    %v159 = vld [vmem:[#allocation8 + $0x40] sm:$0xff]
    %v160 = vld [vmem:[#allocation8 + $0x48] sm:$0xff]
    %v161 = vld [vmem:[#allocation8 + $0x50] sm:$0xff]
    %v162 = vld [vmem:[#allocation8 + $0x58] sm:$0xff]
    %v163 = vld [vmem:[#allocation8 + $0x60] sm:$0xff]
    %v164 = vld [vmem:[#allocation8 + $0x68] sm:$0xff]
    %v165 = vld [vmem:[#allocation8 + $0x70] sm:$0xff]
    %v166 = vld [vmem:[#allocation8 + $0x78] sm:$0xff]
    %167 = vmatpush.msra.mxu0 %v166
    %168 = vmatpush.msra.mxu0 %v165
    %169 = vmatpush.msra.mxu0 %v164
    %170 = vmatpush.msra.mxu0 %v163
    %171 = vmatpush.msra.mxu0 %v162
    %172 = vmatpush.msra.mxu0 %v161
    %173 = vmatpush.msra.mxu0 %v160
    %174 = vmatpush.msra.mxu0 %v159
    %175 = vmatpush.msra.mxu0 %v158
    %176 = vmatpush.msra.mxu0 %v157
    %177 = vmatpush.msra.mxu0 %v156
    %178 = vmatpush.msra.mxu0 %v155
    %179 = vmatpush.msra.mxu0 %v154
    %180 = vmatpush.msra.mxu0 %v153
    %181 = vmatpush.msra.mxu0 %v152
    %182 = vmatpush.msra.mxu0 %v151
    %183 = vmatmul.f32.gmra.mxu0 %v150
    %v184 = vpop.f32.mrf.mxu0
    %v185 = vadd.f32 0.0, %v184
    %186 = vdwg.mxu0
    %p187 = scmp.eq.s32.totalorder 0, 0
    // Predicated region
    $region34: #{tpu_custom_call.1} parent=1 // pred_check
      %p188 = pneg %p187
    $region35: #{tpu_custom_call.1} parent=1 // pred_check_branch
      %190 = sbr.rel (%p188) target = $region37
    $region36: #{tpu_custom_call.1} parent=1 // pred_region
      %191 = vst [vmem:[#allocation2] sm:$0xff] %v185
    $region37: #{tpu_custom_call.1} parent=1 // pred_fallthru
      _
    %p192 = scmp.gt.s32.totalorder 0, 0
    // Predicated region
    $region38: #{tpu_custom_call.1} parent=1 // pred_check
      %p193 = pneg %p192
    $region39: #{tpu_custom_call.1} parent=1 // pred_check_branch
      %195 = sbr.rel (%p193) target = $region41
    $region40: #{tpu_custom_call.1} parent=1 // pred_region
      %v196 = vld [vmem:[#allocation2] sm:$0xff]
      %v197 = vadd.f32 %v196, %v185
      %198 = vst [vmem:[#allocation2] sm:$0xff] %v197
    $region41: #{tpu_custom_call.1} parent=1 // pred_fallthru
      _
    // Predicated region
    $region42: #{tpu_custom_call.1} parent=1 // pred_check
      %p199 = pneg %p187
    $region43: #{tpu_custom_call.1} parent=1 // pred_check_branch
      %201 = sbr.rel (%p199) target = $region45
    $region44: #{tpu_custom_call.1} parent=1 // pred_region
      %v202 = vld [vmem:[#allocation2] sm:$0xff]
      %v203 = vld [vmem:[%s4] sm:$0x1]
      %v205 = vperm.slane %v203, 0
      %v207 = vadd.f32 %v202, %v205
      %208 = vst [vmem:[#allocation9] sm:$0xff] %v207
    $region45: #{tpu_custom_call.1} parent=1 // pred_fallthru
      _
    // Predicated region
    $region46: #{tpu_custom_call.1} parent=1 // pred_check
      _
    $region47: #{tpu_custom_call.1} parent=1 // pred_check_branch
      %210 = sbr.rel (0) target = $region49
    $region48: #{tpu_custom_call.1} parent=1 // pred_region
      %212 = vsyncadd [#allocation5], 0
      %s214 = sshll.u32 [#allocation9], 4
      %s215 = int_to_ptr.vmem [resolvable:$true] %s214
      %s216 = sshll.u32 %s5, 4
      %s217 = int_to_ptr.hbm [resolvable:$true] %s216
      %219 = dma.vmem_to_hbm [thread:$0]  %s215, 128, %s217, [#allocation5]
    $region49: #{tpu_custom_call.1} parent=1 // pred_fallthru
      _
    // Predicated region
    $region50: #{tpu_custom_call.1} parent=1 // pred_check
      _
    $region51: #{tpu_custom_call.1} parent=1 // pred_check_branch
      %221 = sbr.rel (0) target = $region53
    $region52: #{tpu_custom_call.1} parent=1 // pred_region
      %223 = dma.done [#allocation5], 128
    $region53: #{tpu_custom_call.1} parent=1 // pred_fallthru
      _
    %224 = vsyncpa [#allocation4], 1
    %225 = vsyncpa [#allocation7], 1
    %226 = vsyncpa [#allocation5], 1

</llo_original>
